<compile_context>
chip_gen: v5e
topology: v5e:2x2
jax: 0.10.0
libtpu: 0.0.40
codegen_flags: <defaults>
</compile_context>

<pallas_src>
import functools
import math

import jax
import jax.numpy as jnp
from jax.experimental import pallas as pl
from jax.experimental.pallas import tpu as pltpu

_MIB = 1024 * 1024
# Below this, XLA's fused dot beats pallas_call fixed overhead / padding cost.
_SMALL_PROBLEM_FLOPS = 1 << 28          # ~268 MFLOP
_SMALL_PROBLEM_M = 128                  # skinny-M underfills the MXU anyway


def _cdiv(a, b):
    return (a + b - 1) // b


def _round_up(v, m):
    return ((v + m - 1) // m) * m


def _vmem_capacity_bytes():
    """Per-core VMEM capacity; conservative 64 MiB (v7x) fallback."""
    try:
        return int(pltpu.get_tpu_info().vmem_capacity_bytes)
    except Exception:
        return 64 * _MIB


def _sublane(dtype):
    """Minimum sublane granularity for a dtype: 8 (f32), 16 (bf16), 32 (i8)."""
    return max(8, 32 // jnp.dtype(dtype).itemsize)


def _largest_div_tile(total_pad, cap, unit=128):
    """Largest multiple of `unit` <= cap that divides total_pad (falls back to
    unit).  Keeps fringe waste below one `unit` without any array padding."""
    cap = max(unit, min(cap, total_pad))
    t = cap - (cap % unit)
    while t > unit and total_pad % t != 0:
        t -= unit
    return t


# ----------------------------- kernels --------------------------------------
def _proj_simple_kernel(x_ref, w_ref, o_ref):
    """Single K step per output tile: write the MXU result straight out."""
    o_ref[...] = jnp.dot(
        x_ref[...], w_ref[...], preferred_element_type=jnp.float32
    ).astype(o_ref.dtype)


def _proj_ksplit_f32out_kernel(x_ref, w_ref, o_ref):
    """K split across grid axis 2; f32 output block is resident across K, so
    accumulate directly into it (no scratch, no epilogue cast)."""
    @pl.when(pl.program_id(2) == 0)
    def _():
        o_ref[...] = jnp.zeros_like(o_ref)

    o_ref[...] += jnp.dot(
        x_ref[...], w_ref[...], preferred_element_type=jnp.float32
    )


def _proj_ksplit_scratch_kernel(x_ref, w_ref, o_ref, acc_ref):
    """K split across grid axis 2 with narrow (e.g. bf16) output: accumulate
    in an f32 VMEM scratch and cast once on the last K step."""
    @pl.when(pl.program_id(2) == 0)
    def _():
        acc_ref[...] = jnp.zeros_like(acc_ref)

    acc_ref[...] += jnp.dot(
        x_ref[...], w_ref[...], preferred_element_type=jnp.float32
    )

    @pl.when(pl.program_id(2) == pl.num_programs(2) - 1)
    def _():
        o_ref[...] = acc_ref[...].astype(o_ref.dtype)


# ----------------------------- wrapper ---------------------------------------
@functools.partial(
    jax.jit, static_argnames=("use_bf16", "force_pallas", "vmem_budget_bytes")
)
def project_layer_forward(x, proj, *, use_bf16=False, force_pallas=False,
                          vmem_budget_bytes=None):
    """Pallas implementation of `project_layer.forward`: x @ proj.

    x:    [..., in_dim]
    proj: [in_dim, out_dim]
    returns: x @ proj with shape [..., out_dim]

    use_bf16:          cast inputs to bf16 (f32 MXU accumulation) - ~2x MXU
                       throughput on v6e/v7x; off by default to keep the f32
                       semantics of the module.
    force_pallas:      skip the small-problem XLA bypass (testing).
    vmem_budget_bytes: override the VMEM working-set budget (testing).
    """
    *lead, K = x.shape
    Kw, N = proj.shape
    assert K == Kw, "inner dims must match"
    M = int(math.prod(lead)) if lead else 1
    out_dtype = x.dtype
    x2d = x.reshape(M, K)

    flops = 2 * M * K * N

    # --- tiny / skinny-M fast path -------------------------------------------
    if (not force_pallas
            and (flops < _SMALL_PROBLEM_FLOPS or M < _SMALL_PROBLEM_M)) or M < 8:
        out2d = jnp.dot(x2d, proj, preferred_element_type=jnp.float32)
        return out2d.astype(out_dtype).reshape(*lead, N)

    if use_bf16:
        x2d = x2d.astype(jnp.bfloat16)
        proj = proj.astype(jnp.bfloat16)

    in_b = x2d.dtype.itemsize
    w_b = proj.dtype.itemsize
    out_b = jnp.dtype(out_dtype).itemsize
    sub = _sublane(x2d.dtype)           # 8 for f32, 16 for bf16

    vmem_cap = _vmem_capacity_bytes()
    budget = vmem_cap * 3 // 4          # ~48 MiB v7x, ~96 MiB v5e/v6e
    if vmem_budget_bytes is not None:
        budget = int(vmem_budget_bytes)

    cost = pl.CostEstimate(
        flops=flops,
        transcendentals=0,
        bytes_accessed=M * K * in_b + K * N * w_b + M * N * out_b,
    )

    def _run(kernel, grid, in_specs, out_specs, scratch, semantics, footprint,
             x_arr, w_arr):
        vmem_limit = int(min(vmem_cap * 9 // 10,
                             max(32 * _MIB, footprint + 16 * _MIB)))
        out2d = pl.pallas_call(
            kernel,
            out_shape=jax.ShapeDtypeStruct((M, N), out_dtype),
            grid_spec=pltpu.PrefetchScalarGridSpec(
                num_scalar_prefetch=0,
                grid=grid,
                in_specs=in_specs,
                out_specs=out_specs,
                scratch_shapes=scratch,
            ),
            compiler_params=pltpu.CompilerParams(
                dimension_semantics=semantics,
                vmem_limit_bytes=vmem_limit,
            ),
            cost_estimate=cost,
        )(x_arr, w_arr)
        return out2d.reshape(*lead, N)

    # --- shared M-tile selection ---------------------------------------------
    tm_full = _round_up(M, sub)
    tm_max = min(512, tm_full)
    # Keep >=2 grid steps over M when M allows, so v7x's 2 TensorCores both
    # get work (free on v5e/v6e: per-step overhead ~0.35 us).
    if 256 <= M <= 512:
        tm_max = min(tm_max, _round_up(_cdiv(M, 2), sub))
    tm_floor = min(tm_full, 128)

    # --- path 1: whole weight resident (single-buffered), 1-D grid over M ----
    def resident_fits(tm_):
        return (2 * tm_ * K * in_b        # x tile, double-buffered
                + K * N * w_b             # weight: single-buffered (Buffered(1))
                + 2 * tm_ * N * out_b     # out tile, double-buffered
                ) <= budget

    tm = tm_max
    while tm > tm_floor and not resident_fits(tm):
        tm = max(tm_floor, _round_up(tm // 2, sub))

    if resident_fits(tm):
        if _cdiv(M, tm) == 1:
            tm = M                        # exact full-dim block, no fringe
        footprint = 2 * tm * K * in_b + K * N * w_b + 2 * tm * N * out_b
        return _run(
            _proj_simple_kernel,
            grid=(_cdiv(M, tm),),
            in_specs=[
                pl.BlockSpec((tm, K), lambda i: (i, 0)),
                # Constant block index + single buffer: weight DMA'd from HBM
                # exactly once and stays resident for the whole grid.
                pl.BlockSpec((K, N), lambda i: (0, 0),
                             pipeline_mode=pl.Buffered(1)),
            ],
            out_specs=pl.BlockSpec((tm, N), lambda i: (i, 0)),
            scratch=[],
            semantics=("parallel",),
            footprint=footprint,
            x_arr=x2d, w_arr=proj,
        )

    # --- path 2: tile N (full K per block), traffic-aware shrink --------------
    n_pad0 = _round_up(N, 128)
    tn_floor = 256 if n_pad0 >= 256 else n_pad0     # keep the 256^2 MXU fed
    tn = _largest_div_tile(n_pad0, 512)
    tm = tm_max

    def p2_footprint(tm_, tn_):
        return 2 * tm_ * K * in_b + 2 * K * tn_ * w_b + 2 * tm_ * tn_ * out_b

    def hbm_reads(tm_, tn_):
        # x is re-read per N tile, weight per M tile.
        return M * K * in_b * _cdiv(N, tn_) + K * N * w_b * _cdiv(M, tm_)

    while p2_footprint(tm, tn) > budget and (tm > tm_floor or tn > tn_floor):
        can_tm = tm > tm_floor
        can_tn = tn > tn_floor
        tm_next = max(tm_floor, _round_up(tm // 2, sub)) if can_tm else tm
        tn_next = _largest_div_tile(n_pad0, max(tn_floor, tn // 2)) if can_tn else tn
        if can_tm and can_tn:
            # shrink whichever tile adds the least HBM re-read traffic
            if hbm_reads(tm_next, tn) <= hbm_reads(tm, tn_next):
                tm = tm_next
            else:
                tn = tn_next
        elif can_tm:
            tm = tm_next
        else:
            tn = tn_next

    if p2_footprint(tm, tn) <= budget:
        if _cdiv(M, tm) == 1:
            tm = M
        if _cdiv(N, tn) == 1:
            tn = N
        return _run(
            _proj_simple_kernel,
            grid=(_cdiv(M, tm), _cdiv(N, tn)),
            in_specs=[
                pl.BlockSpec((tm, K), lambda i, j: (i, 0)),
                pl.BlockSpec((K, tn), lambda i, j: (0, j)),
            ],
            out_specs=pl.BlockSpec((tm, tn), lambda i, j: (i, j)),
            scratch=[],
            semantics=("parallel", "parallel"),
            footprint=p2_footprint(tm, tn),
            x_arr=x2d, w_arr=proj,
        )

    # --- path 3 (last resort): split K across an "arbitrary" grid axis --------
    k_pad0 = _round_up(K, 128)
    tk_floor = 256 if k_pad0 >= 256 else k_pad0
    direct = jnp.dtype(out_dtype) == jnp.float32    # accumulate into o_ref

    def p3_footprint(tm_, tn_, tk_):
        acc = 0 if direct else tm_ * tn_ * 4
        return (2 * tm_ * tk_ * in_b + 2 * tk_ * tn_ * w_b
                + 2 * tm_ * tn_ * out_b + acc)

    tm = tm_max
    tn = _largest_div_tile(n_pad0, 512)
    tk = _largest_div_tile(k_pad0, 512)
    while (p3_footprint(tm, tn, tk) > budget
           and (tk > tk_floor or tn > tn_floor or tm > tm_floor)):
        if tk > tk_floor:
            tk = _largest_div_tile(k_pad0, max(tk_floor, tk // 2))
        elif tn > tn_floor:
            tn = _largest_div_tile(n_pad0, max(tn_floor, tn // 2))
        else:
            tm = max(tm_floor, _round_up(tm // 2, sub))
    # If still over budget, run anyway (vmem_limit in _run covers it).

    if _cdiv(M, tm) == 1:
        tm = M
    if _cdiv(N, tn) == 1:
        tn = N

    # Only the K fringe ever needs zero fill (exact for a matmul).
    k_pad = _round_up(K, tk)
    if k_pad != K:
        x_arr = jnp.pad(x2d, ((0, 0), (0, k_pad - K)))
        w_arr = jnp.pad(proj, ((0, k_pad - K), (0, 0)))
    else:
        x_arr, w_arr = x2d, proj
    kt = k_pad // tk
    footprint = p3_footprint(tm, tn, tk)

    if kt == 1:
        return _run(
            _proj_simple_kernel,
            grid=(_cdiv(M, tm), _cdiv(N, tn)),
            in_specs=[
                pl.BlockSpec((tm, tk), lambda i, j: (i, 0)),
                pl.BlockSpec((tk, tn), lambda i, j: (0, j)),
            ],
            out_specs=pl.BlockSpec((tm, tn), lambda i, j: (i, j)),
            scratch=[],
            semantics=("parallel", "parallel"),
            footprint=footprint,
            x_arr=x_arr, w_arr=w_arr,
        )

    in_specs = [
        pl.BlockSpec((tm, tk), lambda i, j, k: (i, k)),
        pl.BlockSpec((tk, tn), lambda i, j, k: (k, j)),
    ]
    out_specs = pl.BlockSpec((tm, tn), lambda i, j, k: (i, j))
    if direct:
        return _run(
            _proj_ksplit_f32out_kernel,
            grid=(_cdiv(M, tm), _cdiv(N, tn), kt),
            in_specs=in_specs, out_specs=out_specs,
            scratch=[],
            semantics=("parallel", "parallel", "arbitrary"),
            footprint=footprint,
            x_arr=x_arr, w_arr=w_arr,
        )
    return _run(
        _proj_ksplit_scratch_kernel,
        grid=(_cdiv(M, tm), _cdiv(N, tn), kt),
        in_specs=in_specs, out_specs=out_specs,
        scratch=[pltpu.VMEM((tm, tn), jnp.float32)],
        semantics=("parallel", "parallel", "arbitrary"),
        footprint=footprint,
        x_arr=x_arr, w_arr=w_arr,
    )


if __name__ == "__main__":
    key = jax.random.PRNGKey(0)
    kx, kw = jax.random.split(key)

    # 1) Resident-weight path (path 1): batch=2, seq=64, in_dim=128, out_dim=256.
    B, S, IN_DIM, OUT_DIM = 2, 64, 128, 256
    x = jax.random.normal(kx, (B, S, IN_DIM), dtype=jnp.float32)
    proj = jax.random.normal(kw, (IN_DIM, OUT_DIM), dtype=jnp.float32)
    out = jax.block_until_ready(project_layer_forward(x, proj, force_pallas=True))
    ref = x @ proj
    assert out.shape == (B, S, OUT_DIM)
    assert jnp.allclose(out, ref, atol=1e-4, rtol=1e-4), "resident path mismatch"

    # 2) Non-tile-aligned shapes (full-dim blocks, no padding copies).
    x2 = jax.random.normal(kx, (2, 50, 96), dtype=jnp.float32)
    p2 = jax.random.normal(kw, (96, 160), dtype=jnp.float32)
    out2 = jax.block_until_ready(project_layer_forward(x2, p2, force_pallas=True))
    assert jnp.allclose(out2, x2 @ p2, atol=1e-4, rtol=1e-4), "unaligned path mismatch"

    # 3) K-split path with direct f32 accumulation (tiny budget forces path 3).
    x3 = jax.random.normal(kx, (2, 64, 384), dtype=jnp.float32)
    p3 = jax.random.normal(kw, (384, 256), dtype=jnp.float32)
    out3 = jax.block_until_ready(
        project_layer_forward(x3, p3, force_pallas=True,
                              vmem_budget_bytes=64 * 1024))
    assert jnp.allclose(out3, x3 @ p3, atol=1e-3, rtol=1e-3), "k-split path mismatch"

    # 4) K-split path with bf16 inputs/output (scratch-accumulator kernel).
    x4 = x3.astype(jnp.bfloat16)
    p4 = p3.astype(jnp.bfloat16)
    out4 = jax.block_until_ready(
        project_layer_forward(x4, p4, force_pallas=True,
                              vmem_budget_bytes=64 * 1024))
    ref4 = (x3 @ p3)
    assert jnp.allclose(out4.astype(jnp.float32), ref4, atol=2.5e-1, rtol=2e-2), \
        "bf16 k-split path mismatch"

    # 5) Tiny shapes take the XLA fast path by design.
    x5 = jax.random.normal(kx, (2, 8, 32), dtype=jnp.float32)
    p5 = jax.random.normal(kw, (32, 64), dtype=jnp.float32)
    out5 = jax.block_until_ready(project_layer_forward(x5, p5))
    assert jnp.allclose(out5, x5 @ p5, atol=1e-4, rtol=1e-4), "bypass path mismatch"

    print("KERNEL_OK")
</pallas_src>

<mosaic_0001>
module attributes {stable_mosaic.version = 11 : i64} {
  func.func @_proj_simple_kernel(%arg0: i32, %arg1: memref<128x128xf32, #tpu.memory_space<vmem>>, %arg2: memref<128x256xf32, #tpu.memory_space<vmem>>, %arg3: memref<128x256xf32, #tpu.memory_space<vmem>>) attributes {dimension_semantics = [#tpu.dimension_semantics<parallel>], iteration_bounds = array<i64: 1>, scalar_prefetch = 0 : i64, scratch_operands = 0 : i64, tpu.core_type = #tpu.core_type<tc>, window_params = [{transform_indices = @transform_0, window_bounds = array<i64: 128, 128>}, {pipeline_mode = #tpu.pipeline_mode<synchronous>, transform_indices = @transform_1, window_bounds = array<i64: 128, 256>}, {transform_indices = @transform_2, window_bounds = array<i64: 128, 256>}]} {
    %c0 = arith.constant 0 : index
    %c0_0 = arith.constant 0 : index
    %0 = vector.load %arg1[%c0, %c0_0] : memref<128x128xf32, #tpu.memory_space<vmem>>, vector<128x128xf32>
    %c0_1 = arith.constant 0 : index
    %c0_2 = arith.constant 0 : index
    %1 = vector.load %arg2[%c0_1, %c0_2] : memref<128x256xf32, #tpu.memory_space<vmem>>, vector<128x256xf32>
    %cst = arith.constant dense<0.000000e+00> : vector<128x256xf32>
    %2 = tpu.matmul %0, %1, %cst {dimension_numbers = #tpu.dot_dimension_numbers<[1], [0], [0], [1], [0, 0, 1, 1], [], []>} : vector<128x128xf32>, vector<128x256xf32>, vector<128x256xf32> -> vector<128x256xf32>
    %c0_3 = arith.constant 0 : index
    %c0_4 = arith.constant 0 : index
    %3 = vector.load %arg3[%c0_3, %c0_4] : memref<128x256xf32, #tpu.memory_space<vmem>>, vector<128x256xf32>
    tpu.vector_store %arg3[%c0_3, %c0_4], %2 {strides = array<i32>} : memref<128x256xf32, #tpu.memory_space<vmem>>, vector<128x256xf32>,
    return
  }
  func.func @transform_0(%arg0: i32) -> (i32, i32) {
    %c0_i32 = arith.constant 0 : i32
    %c0_i32_0 = arith.constant 0 : i32
    return %arg0, %c0_i32 : i32, i32
  }
  func.func @transform_1(%arg0: i32) -> (i32, i32) {
    %c0_i32 = arith.constant 0 : i32
    %c0_i32_0 = arith.constant 0 : i32
    %c0_i32_1 = arith.constant 0 : i32
    return %c0_i32, %c0_i32_0 : i32, i32
  }
  func.func @transform_2(%arg0: i32) -> (i32, i32) {
    %c0_i32 = arith.constant 0 : i32
    %c0_i32_0 = arith.constant 0 : i32
    return %arg0, %c0_i32 : i32, i32
  }
}

</mosaic_0001>

<llo_original>
// kernel: project_layer_forward.1
$region0: #{project_layer_forward.1}
  #allocation0 [shape = 'u32[]', space=smem, size = 0x4, offset = 0x4, fixed_abs, tag = 'smem constant byte address 0x4 - core index']
  #allocation1 [shape = 'u32[72,128]{1,0:T(1,128)}', space=vmem, size = 0x9000, scoped, tag = 'internal scratch']
  %s0 = inlined_call_operand.hbm [shape: f32[128,128], index: 0, kind: input, shape index: {}]
  %s1 = inlined_call_operand.hbm [shape: f32[128,256], index: 1, kind: input, shape index: {}]
  %s2 = inlined_call_operand.hbm [shape: f32[128,256], index: 2, kind: output, shape index: {}]
  %s3 = sld [smem:[#allocation0]]
  $region26: #{project_layer_forward.1} parent=0
    _
  %s5 = ssub.s32 1, %s3
  %s6 = scalar_select 0, %s5, %s3
  $region1: #{project_layer_forward.1} parent=0
    #allocation2 [shape = 'u8[65536]{0}', space=vmem, size = 0x10000, scoped, tag = 'input window, operand 0, single buffered']
    #allocation3 [shape = 's32[1]{0}', space=sflag, size = 0x4, scoped, tag = 'scoped memory for project_layer_forward.1']
    #allocation4 [shape = 's32[1]{0}', space=sflag, size = 0x4, scoped, tag = 'scoped memory for project_layer_forward.1']
    #allocation5 [shape = 'u8[131072]{0}', space=vmem, size = 0x20000, scoped, tag = 'input window, operand 1, single buffered']
    #allocation6 [shape = 's32[1]{0}', space=sflag, size = 0x4, scoped, tag = 'scoped memory for project_layer_forward.1']
    #allocation7 [shape = 'u8[131072]{0}', space=vmem, size = 0x20000, scoped, tag = 'output window, operand 0, single buffered']
    %7 = vsyncpa [#allocation3], 0
    %8 = vsyncpa [#allocation6], 0
    %9 = vsyncpa [#allocation4], 0
    // Predicated region
    $region2: #{project_layer_forward.1} parent=1 // pred_check
      _
    $region3: #{project_layer_forward.1} parent=1 // pred_check_branch
      %11 = sbr.rel (0) target = $region5
    $region4: #{project_layer_forward.1} parent=1 // pred_region
      %13 = vsyncadd [#allocation3], 0
      %s14 = sshll.u32 %s0, 4
      %s15 = int_to_ptr.hbm [resolvable:$true] %s14
      %s16 = sshll.u32 [#allocation2], 4
      %s17 = int_to_ptr.vmem [resolvable:$true] %s16
      %22 = dma.hbm_to_vmem [thread:$0]  %s15, 2048, %s17, [#allocation3], 128, 128, 8
    $region5: #{project_layer_forward.1} parent=1 // pred_fallthru
      _
    // Predicated region
    $region6: #{project_layer_forward.1} parent=1 // pred_check
      _
    $region7: #{project_layer_forward.1} parent=1 // pred_check_branch
      %24 = sbr.rel (0) target = $region9
    $region8: #{project_layer_forward.1} parent=1 // pred_region
      %26 = vsyncadd [#allocation6], 0
      %s27 = sshll.u32 %s1, 4
      %s28 = int_to_ptr.hbm [resolvable:$true] %s27
      %s29 = sshll.u32 [#allocation5], 4
      %s30 = int_to_ptr.vmem [resolvable:$true] %s29
      %35 = dma.hbm_to_vmem [thread:$0]  %s28, 4096, %s30, [#allocation6], 256, 256, 16
    $region9: #{project_layer_forward.1} parent=1 // pred_fallthru
      _
    // Predicated region
    $region10: #{project_layer_forward.1} parent=1 // pred_check
      _
    $region11: #{project_layer_forward.1} parent=1 // pred_check_branch
      %37 = sbr.rel (0) target = $region13
    $region12: #{project_layer_forward.1} parent=1 // pred_region
      %39 = dma.done [#allocation3], 2048
    $region13: #{project_layer_forward.1} parent=1 // pred_fallthru
      _
    // Predicated region
    $region14: #{project_layer_forward.1} parent=1 // pred_check
      _
    $region15: #{project_layer_forward.1} parent=1 // pred_check_branch
      %41 = sbr.rel (0) target = $region17
    $region16: #{project_layer_forward.1} parent=1 // pred_region
      %43 = dma.done [#allocation6], 4096
    $region17: #{project_layer_forward.1} parent=1 // pred_fallthru
      _
    %v44 = vld [vmem:[#allocation2] sm:$0xff]
    %v45 = vld [vmem:[#allocation2 + $0x8] sm:$0xff]
    %v46 = vld [vmem:[#allocation2 + $0x10] sm:$0xff]
    %v47 = vld [vmem:[#allocation2 + $0x18] sm:$0xff]
    %v48 = vld [vmem:[#allocation2 + $0x20] sm:$0xff]
    %v49 = vld [vmem:[#allocation2 + $0x28] sm:$0xff]
    %v50 = vld [vmem:[#allocation2 + $0x30] sm:$0xff]
    %v51 = vld [vmem:[#allocation2 + $0x38] sm:$0xff]
    %v52 = vld [vmem:[#allocation2 + $0x40] sm:$0xff]
    %v53 = vld [vmem:[#allocation2 + $0x48] sm:$0xff]
    %v54 = vld [vmem:[#allocation2 + $0x50] sm:$0xff]
    %v55 = vld [vmem:[#allocation2 + $0x58] sm:$0xff]
    %v56 = vld [vmem:[#allocation2 + $0x60] sm:$0xff]
    %v57 = vld [vmem:[#allocation2 + $0x68] sm:$0xff]
    %v58 = vld [vmem:[#allocation2 + $0x70] sm:$0xff]
    %v59 = vld [vmem:[#allocation2 + $0x78] sm:$0xff]
    %v60 = vld [vmem:[#allocation5] sm:$0xff]
    %v61 = vld [vmem:[#allocation5 + $0x8] sm:$0xff]
    %v62 = vld [vmem:[#allocation5 + $0x10] sm:$0xff]
    %v63 = vld [vmem:[#allocation5 + $0x18] sm:$0xff]
    %v64 = vld [vmem:[#allocation5 + $0x20] sm:$0xff]
    %v65 = vld [vmem:[#allocation5 + $0x28] sm:$0xff]
    %v66 = vld [vmem:[#allocation5 + $0x30] sm:$0xff]
    %v67 = vld [vmem:[#allocation5 + $0x38] sm:$0xff]
    %v68 = vld [vmem:[#allocation5 + $0x40] sm:$0xff]
    %v69 = vld [vmem:[#allocation5 + $0x48] sm:$0xff]
    %v70 = vld [vmem:[#allocation5 + $0x50] sm:$0xff]
    %v71 = vld [vmem:[#allocation5 + $0x58] sm:$0xff]
    %v72 = vld [vmem:[#allocation5 + $0x60] sm:$0xff]
    %v73 = vld [vmem:[#allocation5 + $0x68] sm:$0xff]
    %v74 = vld [vmem:[#allocation5 + $0x70] sm:$0xff]
    %v75 = vld [vmem:[#allocation5 + $0x78] sm:$0xff]
    %v76 = vld [vmem:[#allocation5 + $0x80] sm:$0xff]
    %v77 = vld [vmem:[#allocation5 + $0x88] sm:$0xff]
    %v78 = vld [vmem:[#allocation5 + $0x90] sm:$0xff]
    %v79 = vld [vmem:[#allocation5 + $0x98] sm:$0xff]
    %v80 = vld [vmem:[#allocation5 + $0xa0] sm:$0xff]
    %v81 = vld [vmem:[#allocation5 + $0xa8] sm:$0xff]
    %v82 = vld [vmem:[#allocation5 + $0xb0] sm:$0xff]
    %v83 = vld [vmem:[#allocation5 + $0xb8] sm:$0xff]
    %v84 = vld [vmem:[#allocation5 + $0xc0] sm:$0xff]
    %v85 = vld [vmem:[#allocation5 + $0xc8] sm:$0xff]
    %v86 = vld [vmem:[#allocation5 + $0xd0] sm:$0xff]
    %v87 = vld [vmem:[#allocation5 + $0xd8] sm:$0xff]
    %v88 = vld [vmem:[#allocation5 + $0xe0] sm:$0xff]
    %v89 = vld [vmem:[#allocation5 + $0xe8] sm:$0xff]
    %v90 = vld [vmem:[#allocation5 + $0xf0] sm:$0xff]
    %v91 = vld [vmem:[#allocation5 + $0xf8] sm:$0xff]
    %92 = vmatpush.msra.mxu0 %v90
    %93 = vmatpush.msra.mxu0 %v88
    %94 = vmatpush.msra.mxu0 %v86
    %95 = vmatpush.msra.mxu0 %v84
    %96 = vmatpush.msra.mxu0 %v82
    %97 = vmatpush.msra.mxu0 %v80
    %98 = vmatpush.msra.mxu0 %v78
    %99 = vmatpush.msra.mxu0 %v76
    %100 = vmatpush.msra.mxu0 %v74
    %101 = vmatpush.msra.mxu0 %v72
    %102 = vmatpush.msra.mxu0 %v70
    %103 = vmatpush.msra.mxu0 %v68
    %104 = vmatpush.msra.mxu0 %v66
    %105 = vmatpush.msra.mxu0 %v64
    %106 = vmatpush.msra.mxu0 %v62
    %107 = vmatpush.msra.mxu0 %v60
    %108 = vmatmul.f32.gmra.mxu0 %v44
    %v109 = vpop.f32.mrf.mxu0
    %v110 = vadd.f32 0.0, %v109
    %111 = vmatmul.f32.gmra.mxu0 %v45
    %v112 = vpop.f32.mrf.mxu0
    %v113 = vadd.f32 0.0, %v112
    %114 = vmatmul.f32.gmra.mxu0 %v46
    %v115 = vpop.f32.mrf.mxu0
    %v116 = vadd.f32 0.0, %v115
    %117 = vmatmul.f32.gmra.mxu0 %v47
    %v118 = vpop.f32.mrf.mxu0
    %v119 = vadd.f32 0.0, %v118
    %120 = vmatmul.f32.gmra.mxu0 %v48
    %v121 = vpop.f32.mrf.mxu0
    %v122 = vadd.f32 0.0, %v121
    %123 = vmatmul.f32.gmra.mxu0 %v49
    %v124 = vpop.f32.mrf.mxu0
    %v125 = vadd.f32 0.0, %v124
    %126 = vmatmul.f32.gmra.mxu0 %v50
    %v127 = vpop.f32.mrf.mxu0
    %v128 = vadd.f32 0.0, %v127
    %129 = vmatmul.f32.gmra.mxu0 %v51
    %v130 = vpop.f32.mrf.mxu0
    %v131 = vadd.f32 0.0, %v130
    %132 = vmatmul.f32.gmra.mxu0 %v52
    %v133 = vpop.f32.mrf.mxu0
    %v134 = vadd.f32 0.0, %v133
    %135 = vmatmul.f32.gmra.mxu0 %v53
    %v136 = vpop.f32.mrf.mxu0
    %v137 = vadd.f32 0.0, %v136
    %138 = vmatmul.f32.gmra.mxu0 %v54
    %v139 = vpop.f32.mrf.mxu0
    %v140 = vadd.f32 0.0, %v139
    %141 = vmatmul.f32.gmra.mxu0 %v55
    %v142 = vpop.f32.mrf.mxu0
    %v143 = vadd.f32 0.0, %v142
    %144 = vmatmul.f32.gmra.mxu0 %v56
    %v145 = vpop.f32.mrf.mxu0
    %v146 = vadd.f32 0.0, %v145
    %147 = vmatmul.f32.gmra.mxu0 %v57
    %v148 = vpop.f32.mrf.mxu0
    %v149 = vadd.f32 0.0, %v148
    %150 = vmatmul.f32.gmra.mxu0 %v58
    %v151 = vpop.f32.mrf.mxu0
    %v152 = vadd.f32 0.0, %v151
    %153 = vmatmul.f32.gmra.mxu0 %v59
    %v154 = vpop.f32.mrf.mxu0
    %v155 = vadd.f32 0.0, %v154
    %156 = vdwg.mxu0
    %157 = vmatpush.msra.mxu0 %v91
    %158 = vmatpush.msra.mxu0 %v89
    %159 = vmatpush.msra.mxu0 %v87
    %160 = vmatpush.msra.mxu0 %v85
    %161 = vmatpush.msra.mxu0 %v83
    %162 = vmatpush.msra.mxu0 %v81
    %163 = vmatpush.msra.mxu0 %v79
    %164 = vmatpush.msra.mxu0 %v77
    %165 = vmatpush.msra.mxu0 %v75
    %166 = vmatpush.msra.mxu0 %v73
    %167 = vmatpush.msra.mxu0 %v71
    %168 = vmatpush.msra.mxu0 %v69
    %169 = vmatpush.msra.mxu0 %v67
    %170 = vmatpush.msra.mxu0 %v65
    %171 = vmatpush.msra.mxu0 %v63
    %172 = vmatpush.msra.mxu0 %v61
    %173 = vmatmul.f32.gmra.mxu0 %v44
    %v174 = vpop.f32.mrf.mxu0
    %v175 = vadd.f32 0.0, %v174
    %176 = vmatmul.f32.gmra.mxu0 %v45
    %v177 = vpop.f32.mrf.mxu0
    %v178 = vadd.f32 0.0, %v177
    %179 = vmatmul.f32.gmra.mxu0 %v46
    %v180 = vpop.f32.mrf.mxu0
    %v181 = vadd.f32 0.0, %v180
    %182 = vmatmul.f32.gmra.mxu0 %v47
    %v183 = vpop.f32.mrf.mxu0
    %v184 = vadd.f32 0.0, %v183
    %185 = vmatmul.f32.gmra.mxu0 %v48
    %v186 = vpop.f32.mrf.mxu0
    %v187 = vadd.f32 0.0, %v186
    %188 = vmatmul.f32.gmra.mxu0 %v49
    %v189 = vpop.f32.mrf.mxu0
    %v190 = vadd.f32 0.0, %v189
    %191 = vmatmul.f32.gmra.mxu0 %v50
    %v192 = vpop.f32.mrf.mxu0
    %v193 = vadd.f32 0.0, %v192
    %194 = vmatmul.f32.gmra.mxu0 %v51
    %v195 = vpop.f32.mrf.mxu0
    %v196 = vadd.f32 0.0, %v195
    %197 = vmatmul.f32.gmra.mxu0 %v52
    %v198 = vpop.f32.mrf.mxu0
    %v199 = vadd.f32 0.0, %v198
    %200 = vmatmul.f32.gmra.mxu0 %v53
    %v201 = vpop.f32.mrf.mxu0
    %v202 = vadd.f32 0.0, %v201
    %203 = vmatmul.f32.gmra.mxu0 %v54
    %v204 = vpop.f32.mrf.mxu0
    %v205 = vadd.f32 0.0, %v204
    %206 = vmatmul.f32.gmra.mxu0 %v55
    %v207 = vpop.f32.mrf.mxu0
    %v208 = vadd.f32 0.0, %v207
    %209 = vmatmul.f32.gmra.mxu0 %v56
    %v210 = vpop.f32.mrf.mxu0
    %v211 = vadd.f32 0.0, %v210
    %212 = vmatmul.f32.gmra.mxu0 %v57
    %v213 = vpop.f32.mrf.mxu0
    %v214 = vadd.f32 0.0, %v213
    %215 = vmatmul.f32.gmra.mxu0 %v58
    %v216 = vpop.f32.mrf.mxu0
    %v217 = vadd.f32 0.0, %v216
    %218 = vmatmul.f32.gmra.mxu0 %v59
    %v219 = vpop.f32.mrf.mxu0
    %v220 = vadd.f32 0.0, %v219
    %221 = vdwg.mxu0
    %222 = vst [vmem:[#allocation7] sm:$0xff] %v110
    %223 = vst [vmem:[#allocation7 + $0x8] sm:$0xff] %v175
    %224 = vst [vmem:[#allocation7 + $0x10] sm:$0xff] %v113
    %225 = vst [vmem:[#allocation7 + $0x18] sm:$0xff] %v178
    %226 = vst [vmem:[#allocation7 + $0x20] sm:$0xff] %v116
    %227 = vst [vmem:[#allocation7 + $0x28] sm:$0xff] %v181
    %228 = vst [vmem:[#allocation7 + $0x30] sm:$0xff] %v119
    %229 = vst [vmem:[#allocation7 + $0x38] sm:$0xff] %v184
    %230 = vst [vmem:[#allocation7 + $0x40] sm:$0xff] %v122
    %231 = vst [vmem:[#allocation7 + $0x48] sm:$0xff] %v187
    %232 = vst [vmem:[#allocation7 + $0x50] sm:$0xff] %v125
    %233 = vst [vmem:[#allocation7 + $0x58] sm:$0xff] %v190
    %234 = vst [vmem:[#allocation7 + $0x60] sm:$0xff] %v128
    %235 = vst [vmem:[#allocation7 + $0x68] sm:$0xff] %v193
    %236 = vst [vmem:[#allocation7 + $0x70] sm:$0xff] %v131
    %237 = vst [vmem:[#allocation7 + $0x78] sm:$0xff] %v196
    %238 = vst [vmem:[#allocation7 + $0x80] sm:$0xff] %v134
    %239 = vst [vmem:[#allocation7 + $0x88] sm:$0xff] %v199
    %240 = vst [vmem:[#allocation7 + $0x90] sm:$0xff] %v137
    %241 = vst [vmem:[#allocation7 + $0x98] sm:$0xff] %v202
    %242 = vst [vmem:[#allocation7 + $0xa0] sm:$0xff] %v140
    %243 = vst [vmem:[#allocation7 + $0xa8] sm:$0xff] %v205
    %244 = vst [vmem:[#allocation7 + $0xb0] sm:$0xff] %v143
    %245 = vst [vmem:[#allocation7 + $0xb8] sm:$0xff] %v208
    %246 = vst [vmem:[#allocation7 + $0xc0] sm:$0xff] %v146
    %247 = vst [vmem:[#allocation7 + $0xc8] sm:$0xff] %v211
    %248 = vst [vmem:[#allocation7 + $0xd0] sm:$0xff] %v149
    %249 = vst [vmem:[#allocation7 + $0xd8] sm:$0xff] %v214
    %250 = vst [vmem:[#allocation7 + $0xe0] sm:$0xff] %v152
    %251 = vst [vmem:[#allocation7 + $0xe8] sm:$0xff] %v217
    %252 = vst [vmem:[#allocation7 + $0xf0] sm:$0xff] %v155
    %253 = vst [vmem:[#allocation7 + $0xf8] sm:$0xff] %v220
    // Predicated region
    $region18: #{project_layer_forward.1} parent=1 // pred_check
      _
    $region19: #{project_layer_forward.1} parent=1 // pred_check_branch
      %255 = sbr.rel (0) target = $region21
    $region20: #{project_layer_forward.1} parent=1 // pred_region
      %257 = vsyncadd [#allocation4], 0
      %s258 = sshll.u32 [#allocation7], 4
      %s259 = int_to_ptr.vmem [resolvable:$true] %s258
      %s260 = sshll.u32 %s2, 4
      %s261 = int_to_ptr.hbm [resolvable:$true] %s260
      %266 = dma.vmem_to_hbm [thread:$0]  %s259, 4096, %s261, [#allocation4], 256, 256, 16
    $region21: #{project_layer_forward.1} parent=1 // pred_fallthru
      _
    // Predicated region
    $region22: #{project_layer_forward.1} parent=1 // pred_check
      _
    $region23: #{project_layer_forward.1} parent=1 // pred_check_branch
      %268 = sbr.rel (0) target = $region25
    $region24: #{project_layer_forward.1} parent=1 // pred_region
      %270 = dma.done [#allocation4], 4096
    $region25: #{project_layer_forward.1} parent=1 // pred_fallthru
      _
    %271 = vsyncpa [#allocation3], 1
    %272 = vsyncpa [#allocation6], 1
    %273 = vsyncpa [#allocation4], 1

</llo_original>
